<compile_context>
chip_gen: v7x
topology: tpu7x:2x2x1
jax: 0.10.0
libtpu: 0.0.40
codegen_flags: <defaults>
</compile_context>

<pallas_src>
import functools

import jax
import jax.numpy as jnp
from jax import lax
from jax.experimental import pallas as pl
from jax.experimental.pallas import tpu as pltpu

LANES = 128
SUBLANES = 8
GROUP = SUBLANES * LANES      # 1024 elements = one f32 vreg
TILE_GROUPS = 512             # up to (512, 8, 128) f32 = 2 MiB DMA block / input
CHUNK = 32                    # in-kernel sub-chunk of the leading axis (groups)
NUM_CORE_SPLITS = 2           # 2-way parallel split (uses both TCs on v7x)


def _accumulate(x_ref, y_ref, acc_ref, base_group, *, n_groups, tile_groups,
                chunk, masked):
    """Streams the current tile through `chunk`-group pieces and adds the
    per-(8,128)-vreg partial sums [bce, inter, union] into acc_ref rows."""
    nchunk = tile_groups // chunk

    def body(ci, carry):
        bce_a, inter_a, union_a = carry
        start = pl.multiple_of(ci * chunk, chunk)
        x = x_ref[pl.ds(start, chunk), :, :].astype(jnp.float32)
        y = y_ref[pl.ds(start, chunk), :, :].astype(jnp.float32)

        if masked:
            # Only boundary tiles run this branch (gated by pl.when outside).
            g = lax.broadcasted_iota(jnp.int32, x.shape, 0)
            valid = (base_group + start + g) < n_groups
            # Mask at the source: finite sentinel (never -inf: x*y -> NaN).
            x = jnp.where(valid, x, jnp.float32(-100.0))
            y = jnp.where(valid, y, jnp.float32(0.0))

        # Shared exp(-|x|) feeds both the stable BCE-with-logits term and the
        # sigmoid.  Reciprocal goes to the EUP (approx) instead of a full
        # VALU divide-refinement sequence.
        e = jnp.exp(-jnp.abs(x))
        p_abs = pl.reciprocal(1.0 + e, approx=True)         # sigmoid(|x|)
        p = jnp.where(x >= 0.0, p_abs, 1.0 - p_abs)          # sigmoid(x)
        if masked:
            # Kill any approx-reciprocal epsilon from masked elements exactly.
            p = jnp.where(valid, p, jnp.float32(0.0))
        bce = jnp.maximum(x, 0.0) - x * y + jnp.log1p(e)

        return (bce_a + jnp.sum(bce, axis=0),
                inter_a + jnp.sum(y * p, axis=0),
                union_a + jnp.sum(p + y, axis=0))

    zero = jnp.zeros((SUBLANES, LANES), jnp.float32)
    bce_s, inter_s, union_s = lax.fori_loop(0, nchunk, body,
                                            (zero, zero, zero), unroll=True)
    acc_ref[0, :, :] += bce_s
    acc_ref[1, :, :] += inter_s
    acc_ref[2, :, :] += union_s


def _dice_bin_kernel(x_ref, y_ref, acc_ref, *, n_groups, tile_groups,
                     tiles_per_core, chunk):
    c = pl.program_id(0)          # core-split axis ("parallel")
    i = pl.program_id(1)          # tile axis        ("arbitrary")

    @pl.when(i == 0)
    def _init():
        acc_ref[...] = jnp.zeros_like(acc_ref)

    t = c * tiles_per_core + i            # logical tile index
    base_group = t * tile_groups          # first group handled by this tile
    is_full = (base_group + tile_groups) <= n_groups

    # Steady-state path: no iota / mask work at all.
    @pl.when(is_full)
    def _steady():
        _accumulate(x_ref, y_ref, acc_ref, base_group, n_groups=n_groups,
                    tile_groups=tile_groups, chunk=chunk, masked=False)

    # Boundary path: runs only for tiles overlapping the ragged end (including
    # the fully-out-of-range duplicated tile when the tile count is odd).
    @pl.when(jnp.logical_not(is_full))
    def _tail():
        _accumulate(x_ref, y_ref, acc_ref, base_group, n_groups=n_groups,
                    tile_groups=tile_groups, chunk=chunk, masked=True)


def _partial_sums_jnp(x, y):
    """Pure-JAX partial sums [bce_sum, inter, union] for tiny remainders."""
    x = x.astype(jnp.float32)
    y = y.astype(jnp.float32)
    bce = jnp.sum(jnp.maximum(x, 0.0) - x * y + jnp.log1p(jnp.exp(-jnp.abs(x))))
    p = jax.nn.sigmoid(x)
    return bce, jnp.sum(y * p), jnp.sum(p) + jnp.sum(y)


@jax.jit
def dice_loss_bin(output, label):
    """Returns (dice_l + bce_l, IOU), matching DiceLoss_BIN.forward.

    `output` / `label` may be any dtype (bf16 / uint8 / bool labels are fine);
    the cast to f32 happens inside the kernel, so no extra HBM pass is added.
    """
    n_elem = output.size                       # static under jit
    x = output.reshape(-1)
    y = label.reshape(-1)

    groups = n_elem // GROUP                   # whole 1024-element vregs
    n_main = groups * GROUP
    rem = n_elem - n_main

    if groups == 0:
        # Tiny input: no kernel launch needed.
        bce_sum, inter, union = _partial_sums_jnp(x, y)
    else:
        xm = x[:n_main].reshape(groups, SUBLANES, LANES)
        ym = y[:n_main].reshape(groups, SUBLANES, LANES)

        if groups >= CHUNK:
            tile_groups = min(TILE_GROUPS, (groups // CHUNK) * CHUNK)
            chunk = CHUNK
        else:
            tile_groups = groups
            chunk = groups

        n_tiles = pl.cdiv(groups, tile_groups)
        tiles_per_core = pl.cdiv(n_tiles, NUM_CORE_SPLITS)

        kernel = functools.partial(
            _dice_bin_kernel, n_groups=groups, tile_groups=tile_groups,
            tiles_per_core=tiles_per_core, chunk=chunk)

        # Clamp the block index so the (possibly) duplicated last tile of the
        # odd split never maps out of range; its contribution is masked to 0.
        in_map = lambda c, i: (
            jnp.minimum(c * tiles_per_core + i, n_tiles - 1), 0, 0)
        out_map = lambda c, i: (c, 0, 0)

        acc = pl.pallas_call(
            kernel,
            out_shape=jax.ShapeDtypeStruct(
                (NUM_CORE_SPLITS * 3, SUBLANES, LANES), jnp.float32),
            grid_spec=pltpu.PrefetchScalarGridSpec(
                num_scalar_prefetch=0,
                grid=(NUM_CORE_SPLITS, tiles_per_core),
                in_specs=[
                    pl.BlockSpec((tile_groups, SUBLANES, LANES), in_map),
                    pl.BlockSpec((tile_groups, SUBLANES, LANES), in_map),
                ],
                out_specs=pl.BlockSpec((3, SUBLANES, LANES), out_map),
            ),
            compiler_params=pltpu.CompilerParams(
                dimension_semantics=("parallel", "arbitrary"),
                vmem_limit_bytes=32 * 1024 * 1024,
            ),
        )(xm, ym)

        # Final tiny reduction: (2*3, 8, 128) -> 3 scalars.
        sums = jnp.sum(acc.reshape(NUM_CORE_SPLITS, 3, -1), axis=(0, 2))
        bce_sum, inter, union = sums[0], sums[1], sums[2]

    if rem:
        # < 1024-element epilogue in plain JAX instead of a full-array pad.
        bce_r, inter_r, union_r = _partial_sums_jnp(x[n_main:], y[n_main:])
        bce_sum = bce_sum + bce_r
        inter = inter + inter_r
        union = union + union_r

    bce_l = bce_sum / jnp.float32(n_elem)           # BCEWithLogitsLoss mean
    smooth = jnp.float32(1.0)
    dice_l = 1.0 - (2.0 * inter + smooth) / (union + smooth)
    iou = inter / (union - inter)                   # may be NaN for empty masks
    return dice_l + bce_l, iou


def _reference(output, label):
    x = output.reshape(-1).astype(jnp.float32)
    y = label.reshape(-1).astype(jnp.float32)
    bce = jnp.mean(jnp.maximum(x, 0.0) - x * y + jnp.log1p(jnp.exp(-jnp.abs(x))))
    p = jax.nn.sigmoid(x)
    inter = jnp.sum(y * p)
    union = jnp.sum(p) + jnp.sum(y)
    dice_l = 1.0 - (2.0 * inter + 1.0) / (union + 1.0)
    iou = inter / (union - inter)
    return dice_l + bce, iou


if __name__ == "__main__":
    key = jax.random.PRNGKey(0)
    tol = dict(atol=2e-3, rtol=2e-3)   # approx EUP reciprocal in the sigmoid

    # Case 1: NCHW logits / binary labels, size an exact multiple of 1024.
    k1, k2, k3, k4 = jax.random.split(key, 4)
    x1 = jax.random.normal(k1, (2, 4, 16, 16), dtype=jnp.float32)
    y1 = (jax.random.uniform(k2, (2, 4, 16, 16)) > 0.5).astype(jnp.float32)
    loss1, iou1 = dice_loss_bin(x1, y1)
    jax.block_until_ready((loss1, iou1))
    ref_loss1, ref_iou1 = _reference(x1, y1)
    assert jnp.allclose(loss1, ref_loss1, **tol), (loss1, ref_loss1)
    assert jnp.allclose(iou1, ref_iou1, **tol), (iou1, ref_iou1)

    # Case 2: ragged size (exercises masked boundary tiles + jnp epilogue).
    x2 = jax.random.normal(k3, (3, 5, 17, 13), dtype=jnp.float32)
    y2 = (jax.random.uniform(k4, (3, 5, 17, 13)) > 0.5).astype(jnp.float32)
    loss2, iou2 = dice_loss_bin(x2, y2)
    jax.block_until_ready((loss2, iou2))
    ref_loss2, ref_iou2 = _reference(x2, y2)
    assert jnp.allclose(loss2, ref_loss2, **tol), (loss2, ref_loss2)
    assert jnp.allclose(iou2, ref_iou2, **tol), (iou2, ref_iou2)

    print("KERNEL_OK")
</pallas_src>

<mosaic_0001>
module attributes {stable_mosaic.version = 11 : i64} {
  func.func @_dice_bin_kernel(%arg0: i32, %arg1: i32, %arg2: memref<2x8x128xf32, #tpu.memory_space<vmem>>, %arg3: memref<2x8x128xf32, #tpu.memory_space<vmem>>, %arg4: memref<3x8x128xf32, #tpu.memory_space<vmem>>) attributes {dimension_semantics = [#tpu.dimension_semantics<parallel>, #tpu.dimension_semantics<arbitrary>], iteration_bounds = array<i64: 2, 1>, scalar_prefetch = 0 : i64, scratch_operands = 0 : i64, tpu.core_type = #tpu.core_type<tc>, window_params = [{transform_indices = @transform_0, window_bounds = array<i64: 2, 8, 128>}, {transform_indices = @transform_1, window_bounds = array<i64: 2, 8, 128>}, {transform_indices = @transform_2, window_bounds = array<i64: 3, 8, 128>}]} {
    %c0_i32 = arith.constant 0 : i32
    %0 = arith.cmpi eq, %arg1, %c0_i32 : i32
    %1 = arith.extui %0 : i1 to i32
    %c0_i32_0 = arith.constant 0 : i32
    %2 = arith.cmpi ne, %1, %c0_i32_0 : i32
    scf.if %2 {
      %cst = arith.constant 0.000000e+00 : f32
      %13 = vector.broadcast %cst : f32 to vector<3x8x128xf32>
      %c0 = arith.constant 0 : index
      %c0_5 = arith.constant 0 : index
      %c0_6 = arith.constant 0 : index
      %14 = vector.load %arg4[%c0, %c0_5, %c0_6] : memref<3x8x128xf32, #tpu.memory_space<vmem>>, vector<3x8x128xf32>
      tpu.vector_store %arg4[%c0, %c0_5, %c0_6], %13 {strides = array<i32>} : memref<3x8x128xf32, #tpu.memory_space<vmem>>, vector<3x8x128xf32>,
    } else {
    }
    %c1_i32 = arith.constant 1 : i32
    %3 = arith.muli %arg0, %c1_i32 : i32
    %4 = arith.addi %3, %arg1 : i32
    %c2_i32 = arith.constant 2 : i32
    %5 = arith.muli %4, %c2_i32 : i32
    %c2_i32_1 = arith.constant 2 : i32
    %6 = arith.addi %5, %c2_i32_1 : i32
    %c2_i32_2 = arith.constant 2 : i32
    %7 = arith.cmpi sle, %6, %c2_i32_2 : i32
    %8 = arith.extui %7 : i1 to i32
    %c0_i32_3 = arith.constant 0 : i32
    %9 = arith.cmpi ne, %8, %c0_i32_3 : i32
    scf.if %9 {
      %cst = arith.constant 0.000000e+00 : f32
      %13 = vector.broadcast %cst : f32 to vector<8x128xf32>
      %c0_i32_5 = arith.constant 0 : i32
      %c2_i32_6 = arith.constant 2 : i32
      %14 = arith.muli %c0_i32_5, %c2_i32_6 : i32
      %15 = tpu.assume_multiple %14, 2 : i32
      %16 = arith.index_cast %15 : i32 to index
      %c0 = arith.constant 0 : index
      %c0_7 = arith.constant 0 : index
      %17 = vector.load %arg2[%16, %c0, %c0_7] : memref<2x8x128xf32, #tpu.memory_space<vmem>>, vector<2x8x128xf32>
      %18 = arith.index_cast %15 : i32 to index
      %c0_8 = arith.constant 0 : index
      %c0_9 = arith.constant 0 : index
      %19 = vector.load %arg3[%18, %c0_8, %c0_9] : memref<2x8x128xf32, #tpu.memory_space<vmem>>, vector<2x8x128xf32>
      %20 = math.absf %17 : vector<2x8x128xf32>
      %cst_10 = arith.constant 0.000000e+00 : f32
      %21 = vector.broadcast %cst_10 : f32 to vector<2x8x128xf32>
      %22 = arith.subf %21, %20 : vector<2x8x128xf32>
      %23 = math.exp %22 : vector<2x8x128xf32>
      %cst_11 = arith.constant 1.000000e+00 : f32
      %24 = vector.broadcast %cst_11 : f32 to vector<2x8x128xf32>
      %25 = arith.addf %24, %23 : vector<2x8x128xf32>
      %26 = tpu.reciprocal %25 {approx = true} : vector<2x8x128xf32> -> vector<2x8x128xf32>
      %cst_12 = arith.constant 0.000000e+00 : f32
      %27 = vector.broadcast %cst_12 : f32 to vector<2x8x128xf32>
      %28 = arith.cmpf oge, %17, %27 : vector<2x8x128xf32>
      %cst_13 = arith.constant 1.000000e+00 : f32
      %29 = vector.broadcast %cst_13 : f32 to vector<2x8x128xf32>
      %30 = arith.subf %29, %26 : vector<2x8x128xf32>
      %31 = arith.select %28, %26, %30 : vector<2x8x128xi1>, vector<2x8x128xf32>
      %cst_14 = arith.constant 0.000000e+00 : f32
      %32 = vector.broadcast %cst_14 : f32 to vector<2x8x128xf32>
      %33 = arith.maximumf %17, %32 : vector<2x8x128xf32>
      %34 = arith.mulf %17, %19 : vector<2x8x128xf32>
      %35 = arith.subf %33, %34 : vector<2x8x128xf32>
      %36 = math.log1p %23 : vector<2x8x128xf32>
      %37 = arith.addf %35, %36 : vector<2x8x128xf32>
      %cst_15 = arith.constant dense<0.000000e+00> : vector<8x128xf32>
      %38 = vector.multi_reduction <add>, %37, %cst_15 [0] : vector<2x8x128xf32> to vector<8x128xf32>
      %39 = arith.addf %13, %38 : vector<8x128xf32>
      %40 = arith.mulf %19, %31 : vector<2x8x128xf32>
      %cst_16 = arith.constant dense<0.000000e+00> : vector<8x128xf32>
      %41 = vector.multi_reduction <add>, %40, %cst_16 [0] : vector<2x8x128xf32> to vector<8x128xf32>
      %42 = arith.addf %13, %41 : vector<8x128xf32>
      %43 = arith.addf %31, %19 : vector<2x8x128xf32>
      %cst_17 = arith.constant dense<0.000000e+00> : vector<8x128xf32>
      %44 = vector.multi_reduction <add>, %43, %cst_17 [0] : vector<2x8x128xf32> to vector<8x128xf32>
      %45 = arith.addf %13, %44 : vector<8x128xf32>
      %c1_i32_18 = arith.constant 1 : i32
      %c0_19 = arith.constant 0 : index
      %c0_20 = arith.constant 0 : index
      %c0_21 = arith.constant 0 : index
      %46 = vector.load %arg4[%c0_19, %c0_20, %c0_21] : memref<3x8x128xf32, #tpu.memory_space<vmem>>, vector<1x8x128xf32>
      %47 = vector.shape_cast %46 : vector<1x8x128xf32> to vector<8x128xf32>
      %48 = arith.addf %47, %39 : vector<8x128xf32>
      %c0_22 = arith.constant 0 : index
      %c0_23 = arith.constant 0 : index
      %c0_24 = arith.constant 0 : index
      %49 = vector.load %arg4[%c0_22, %c0_23, %c0_24] : memref<3x8x128xf32, #tpu.memory_space<vmem>>, vector<1x8x128xf32>
      %50 = vector.shape_cast %49 : vector<1x8x128xf32> to vector<8x128xf32>
      %51 = vector.shape_cast %48 : vector<8x128xf32> to vector<1x8x128xf32>
      tpu.vector_store %arg4[%c0_22, %c0_23, %c0_24], %51 {strides = array<i32>} : memref<3x8x128xf32, #tpu.memory_space<vmem>>, vector<1x8x128xf32>,
      %c1 = arith.constant 1 : index
      %c0_25 = arith.constant 0 : index
      %c0_26 = arith.constant 0 : index
      %52 = vector.load %arg4[%c1, %c0_25, %c0_26] : memref<3x8x128xf32, #tpu.memory_space<vmem>>, vector<1x8x128xf32>
      %53 = vector.shape_cast %52 : vector<1x8x128xf32> to vector<8x128xf32>
      %54 = arith.addf %53, %42 : vector<8x128xf32>
      %c1_27 = arith.constant 1 : index
      %c0_28 = arith.constant 0 : index
      %c0_29 = arith.constant 0 : index
      %55 = vector.load %arg4[%c1_27, %c0_28, %c0_29] : memref<3x8x128xf32, #tpu.memory_space<vmem>>, vector<1x8x128xf32>
      %56 = vector.shape_cast %55 : vector<1x8x128xf32> to vector<8x128xf32>
      %57 = vector.shape_cast %54 : vector<8x128xf32> to vector<1x8x128xf32>
      tpu.vector_store %arg4[%c1_27, %c0_28, %c0_29], %57 {strides = array<i32>} : memref<3x8x128xf32, #tpu.memory_space<vmem>>, vector<1x8x128xf32>,
      %c2 = arith.constant 2 : index
      %c0_30 = arith.constant 0 : index
      %c0_31 = arith.constant 0 : index
      %58 = vector.load %arg4[%c2, %c0_30, %c0_31] : memref<3x8x128xf32, #tpu.memory_space<vmem>>, vector<1x8x128xf32>
      %59 = vector.shape_cast %58 : vector<1x8x128xf32> to vector<8x128xf32>
      %60 = arith.addf %59, %45 : vector<8x128xf32>
      %c2_32 = arith.constant 2 : index
      %c0_33 = arith.constant 0 : index
      %c0_34 = arith.constant 0 : index
      %61 = vector.load %arg4[%c2_32, %c0_33, %c0_34] : memref<3x8x128xf32, #tpu.memory_space<vmem>>, vector<1x8x128xf32>
      %62 = vector.shape_cast %61 : vector<1x8x128xf32> to vector<8x128xf32>
      %63 = vector.shape_cast %60 : vector<8x128xf32> to vector<1x8x128xf32>
      tpu.vector_store %arg4[%c2_32, %c0_33, %c0_34], %63 {strides = array<i32>} : memref<3x8x128xf32, #tpu.memory_space<vmem>>, vector<1x8x128xf32>,
    } else {
    }
    %true = arith.constant true
    %10 = arith.xori %7, %true : i1
    %11 = arith.extui %10 : i1 to i32
    %c0_i32_4 = arith.constant 0 : i32
    %12 = arith.cmpi ne, %11, %c0_i32_4 : i32
    scf.if %12 {
      %cst = arith.constant 0.000000e+00 : f32
      %13 = vector.broadcast %cst : f32 to vector<8x128xf32>
      %c0_i32_5 = arith.constant 0 : i32
      %c2_i32_6 = arith.constant 2 : i32
      %14 = arith.muli %c0_i32_5, %c2_i32_6 : i32
      %15 = tpu.assume_multiple %14, 2 : i32
      %16 = arith.index_cast %15 : i32 to index
      %c0 = arith.constant 0 : index
      %c0_7 = arith.constant 0 : index
      %17 = vector.load %arg2[%16, %c0, %c0_7] : memref<2x8x128xf32, #tpu.memory_space<vmem>>, vector<2x8x128xf32>
      %18 = arith.index_cast %15 : i32 to index
      %c0_8 = arith.constant 0 : index
      %c0_9 = arith.constant 0 : index
      %19 = vector.load %arg3[%18, %c0_8, %c0_9] : memref<2x8x128xf32, #tpu.memory_space<vmem>>, vector<2x8x128xf32>
      %20 = tpu.iota {dimensions = array<i32: 0>} : vector<2x8x128xi32>
      %21 = arith.addi %5, %15 : i32
      %22 = vector.broadcast %21 : i32 to vector<2x8x128xi32>
      %23 = arith.addi %22, %20 : vector<2x8x128xi32>
      %c2_i32_10 = arith.constant 2 : i32
      %24 = vector.broadcast %c2_i32_10 : i32 to vector<2x8x128xi32>
      %25 = arith.cmpi slt, %23, %24 : vector<2x8x128xi32>
      %cst_11 = arith.constant -1.000000e+02 : f32
      %26 = vector.broadcast %cst_11 : f32 to vector<2x8x128xf32>
      %27 = arith.select %25, %17, %26 : vector<2x8x128xi1>, vector<2x8x128xf32>
      %cst_12 = arith.constant 0.000000e+00 : f32
      %28 = vector.broadcast %cst_12 : f32 to vector<2x8x128xf32>
      %29 = arith.select %25, %19, %28 : vector<2x8x128xi1>, vector<2x8x128xf32>
      %30 = math.absf %27 : vector<2x8x128xf32>
      %cst_13 = arith.constant 0.000000e+00 : f32
      %31 = vector.broadcast %cst_13 : f32 to vector<2x8x128xf32>
      %32 = arith.subf %31, %30 : vector<2x8x128xf32>
      %33 = math.exp %32 : vector<2x8x128xf32>
      %cst_14 = arith.constant 1.000000e+00 : f32
      %34 = vector.broadcast %cst_14 : f32 to vector<2x8x128xf32>
      %35 = arith.addf %34, %33 : vector<2x8x128xf32>
      %36 = tpu.reciprocal %35 {approx = true} : vector<2x8x128xf32> -> vector<2x8x128xf32>
      %cst_15 = arith.constant 0.000000e+00 : f32
      %37 = vector.broadcast %cst_15 : f32 to vector<2x8x128xf32>
      %38 = arith.cmpf oge, %27, %37 : vector<2x8x128xf32>
      %cst_16 = arith.constant 1.000000e+00 : f32
      %39 = vector.broadcast %cst_16 : f32 to vector<2x8x128xf32>
      %40 = arith.subf %39, %36 : vector<2x8x128xf32>
      %41 = arith.select %38, %36, %40 : vector<2x8x128xi1>, vector<2x8x128xf32>
      %cst_17 = arith.constant 0.000000e+00 : f32
      %42 = vector.broadcast %cst_17 : f32 to vector<2x8x128xf32>
      %43 = arith.select %25, %41, %42 : vector<2x8x128xi1>, vector<2x8x128xf32>
      %cst_18 = arith.constant 0.000000e+00 : f32
      %44 = vector.broadcast %cst_18 : f32 to vector<2x8x128xf32>
      %45 = arith.maximumf %27, %44 : vector<2x8x128xf32>
      %46 = arith.mulf %27, %29 : vector<2x8x128xf32>
      %47 = arith.subf %45, %46 : vector<2x8x128xf32>
      %48 = math.log1p %33 : vector<2x8x128xf32>
      %49 = arith.addf %47, %48 : vector<2x8x128xf32>
      %cst_19 = arith.constant dense<0.000000e+00> : vector<8x128xf32>
      %50 = vector.multi_reduction <add>, %49, %cst_19 [0] : vector<2x8x128xf32> to vector<8x128xf32>
      %51 = arith.addf %13, %50 : vector<8x128xf32>
      %52 = arith.mulf %29, %43 : vector<2x8x128xf32>
      %cst_20 = arith.constant dense<0.000000e+00> : vector<8x128xf32>
      %53 = vector.multi_reduction <add>, %52, %cst_20 [0] : vector<2x8x128xf32> to vector<8x128xf32>
      %54 = arith.addf %13, %53 : vector<8x128xf32>
      %55 = arith.addf %43, %29 : vector<2x8x128xf32>
      %cst_21 = arith.constant dense<0.000000e+00> : vector<8x128xf32>
      %56 = vector.multi_reduction <add>, %55, %cst_21 [0] : vector<2x8x128xf32> to vector<8x128xf32>
      %57 = arith.addf %13, %56 : vector<8x128xf32>
      %c1_i32_22 = arith.constant 1 : i32
      %c0_23 = arith.constant 0 : index
      %c0_24 = arith.constant 0 : index
      %c0_25 = arith.constant 0 : index
      %58 = vector.load %arg4[%c0_23, %c0_24, %c0_25] : memref<3x8x128xf32, #tpu.memory_space<vmem>>, vector<1x8x128xf32>
      %59 = vector.shape_cast %58 : vector<1x8x128xf32> to vector<8x128xf32>
      %60 = arith.addf %59, %51 : vector<8x128xf32>
      %c0_26 = arith.constant 0 : index
      %c0_27 = arith.constant 0 : index
      %c0_28 = arith.constant 0 : index
      %61 = vector.load %arg4[%c0_26, %c0_27, %c0_28] : memref<3x8x128xf32, #tpu.memory_space<vmem>>, vector<1x8x128xf32>
      %62 = vector.shape_cast %61 : vector<1x8x128xf32> to vector<8x128xf32>
      %63 = vector.shape_cast %60 : vector<8x128xf32> to vector<1x8x128xf32>
      tpu.vector_store %arg4[%c0_26, %c0_27, %c0_28], %63 {strides = array<i32>} : memref<3x8x128xf32, #tpu.memory_space<vmem>>, vector<1x8x128xf32>,
      %c1 = arith.constant 1 : index
      %c0_29 = arith.constant 0 : index
      %c0_30 = arith.constant 0 : index
      %64 = vector.load %arg4[%c1, %c0_29, %c0_30] : memref<3x8x128xf32, #tpu.memory_space<vmem>>, vector<1x8x128xf32>
      %65 = vector.shape_cast %64 : vector<1x8x128xf32> to vector<8x128xf32>
      %66 = arith.addf %65, %54 : vector<8x128xf32>
      %c1_31 = arith.constant 1 : index
      %c0_32 = arith.constant 0 : index
      %c0_33 = arith.constant 0 : index
      %67 = vector.load %arg4[%c1_31, %c0_32, %c0_33] : memref<3x8x128xf32, #tpu.memory_space<vmem>>, vector<1x8x128xf32>
      %68 = vector.shape_cast %67 : vector<1x8x128xf32> to vector<8x128xf32>
      %69 = vector.shape_cast %66 : vector<8x128xf32> to vector<1x8x128xf32>
      tpu.vector_store %arg4[%c1_31, %c0_32, %c0_33], %69 {strides = array<i32>} : memref<3x8x128xf32, #tpu.memory_space<vmem>>, vector<1x8x128xf32>,
      %c2 = arith.constant 2 : index
      %c0_34 = arith.constant 0 : index
      %c0_35 = arith.constant 0 : index
      %70 = vector.load %arg4[%c2, %c0_34, %c0_35] : memref<3x8x128xf32, #tpu.memory_space<vmem>>, vector<1x8x128xf32>
      %71 = vector.shape_cast %70 : vector<1x8x128xf32> to vector<8x128xf32>
      %72 = arith.addf %71, %57 : vector<8x128xf32>
      %c2_36 = arith.constant 2 : index
      %c0_37 = arith.constant 0 : index
      %c0_38 = arith.constant 0 : index
      %73 = vector.load %arg4[%c2_36, %c0_37, %c0_38] : memref<3x8x128xf32, #tpu.memory_space<vmem>>, vector<1x8x128xf32>
      %74 = vector.shape_cast %73 : vector<1x8x128xf32> to vector<8x128xf32>
      %75 = vector.shape_cast %72 : vector<8x128xf32> to vector<1x8x128xf32>
      tpu.vector_store %arg4[%c2_36, %c0_37, %c0_38], %75 {strides = array<i32>} : memref<3x8x128xf32, #tpu.memory_space<vmem>>, vector<1x8x128xf32>,
    } else {
    }
    return
  }
  func.func @transform_0(%arg0: i32, %arg1: i32) -> (i32, i32, i32) {
    %c1_i32 = arith.constant 1 : i32
    %0 = arith.muli %arg0, %c1_i32 : i32
    %1 = arith.addi %0, %arg1 : i32
    %c0_i32 = arith.constant 0 : i32
    %2 = arith.minsi %1, %c0_i32 : i32
    %c0_i32_0 = arith.constant 0 : i32
    %c0_i32_1 = arith.constant 0 : i32
    %c0_i32_2 = arith.constant 0 : i32
    return %2, %c0_i32_0, %c0_i32_1 : i32, i32, i32
  }
  func.func @transform_1(%arg0: i32, %arg1: i32) -> (i32, i32, i32) {
    %c1_i32 = arith.constant 1 : i32
    %0 = arith.muli %arg0, %c1_i32 : i32
    %1 = arith.addi %0, %arg1 : i32
    %c0_i32 = arith.constant 0 : i32
    %2 = arith.minsi %1, %c0_i32 : i32
    %c0_i32_0 = arith.constant 0 : i32
    %c0_i32_1 = arith.constant 0 : i32
    %c0_i32_2 = arith.constant 0 : i32
    return %2, %c0_i32_0, %c0_i32_1 : i32, i32, i32
  }
  func.func @transform_2(%arg0: i32, %arg1: i32) -> (i32, i32, i32) {
    %c0_i32 = arith.constant 0 : i32
    %c0_i32_0 = arith.constant 0 : i32
    %c0_i32_1 = arith.constant 0 : i32
    return %arg0, %c0_i32, %c0_i32_0 : i32, i32, i32
  }
}

</mosaic_0001>

<llo_original>
// kernel: dice_loss_bin.1
$region0: #{dice_loss_bin.1}
  #allocation0 [shape = 'u32[]', space=smem, size = 0x4, offset = 0x4, fixed_abs, tag = 'smem constant byte address 0x4 - core index']
  #allocation1 [shape = 'u32[144,128]{1,0:T(1,128)}', space=vmem, size = 0x12000, scoped, tag = 'internal scratch']
  %s0 = inlined_call_operand.vmem [shape: f32[2,8,128], index: 0, kind: input, shape index: {}]
  %s1 = inlined_call_operand.vmem [shape: f32[2,8,128], index: 1, kind: input, shape index: {}]
  %s2 = inlined_call_operand.vmem [shape: f32[6,8,128], index: 2, kind: output, shape index: {}]
  %s3 = sld [smem:[#allocation0]]
  $region53: #{dice_loss_bin.1} parent=0
    _
  %s5 = ssub.s32 1, %s3
  %s6 = scalar_select 0, %s5, %s3
  loop: start=0, step=1, limit=4
  $region2: #{dice_loss_bin.1} parent=0 // loop_pre_header
    _
  $region3: #{dice_loss_bin.1} parent=0 // loop_header
    %s8 = sphi 0, %s12
    %p9 = scmp.ge.s32.totalorder %s8, 4
    %s15 = sphi 0, %s27
    %s16 = sphi 0, %s23
    %s17 = sphi 0, %s15
    %s18 = sphi 0, %s16
    %s19 = sphi 0, %s17
    %s20 = sphi 0, %s18
    %s36 = sphi 0, %s38
    %s39 = sphi 0, %s36
    %s40 = sphi 0, %s39
    %s56 = sphi 0, %s40
    %s68 = sphi 0, %s70
    %s71 = sphi 0, %s68
    %s72 = sphi 0, %s71
    %s88 = sphi 0, %s72
    %s94 = sphi 0, %s96
    %s97 = sphi 0, %s94
    %s98 = sphi 0, %s97
    %s114 = sphi 0, %s98
  $region4: #{dice_loss_bin.1} parent=0 // loop_header_branch
    %11 = sbr.rel (%p9) target = $region8
  $region5: #{dice_loss_bin.1} parent=0 // loop_body
    %s13 = ssub.s32 %s8, 1
    %s14 = ssub.s32 %s8, 2
    %s21 = sadd.s32 1, %s16
    %p22 = scmp.ge.s32.totalorder %s21, 1
    %s23 = scalar_select %p22, 0, %s21
    %s24 = sadd.s32 1, %s15
    %s25 = scalar_select %p22, %s24, %s15
    %p26 = scmp.ge.s32.totalorder %s25, 2
    %s27 = scalar_select %p26, 0, %s25
    %s28 = sadd.s32 %s15, %s16
    %p29 = scmp.lt.s32.totalorder %s28, 0
    %s30 = scalar_select %p29, %s28, 0
    %s31 = sadd.s32 %s27, %s23
    %p32 = scmp.lt.s32.totalorder %s31, 0
    %s33 = scalar_select %p32, %s31, 0
    %s34 = ssub.s32 %s30, %s33
    %p35 = scmp.eq.s32.totalorder %s34, 0
    %s37 = sadd.s32 %s36, 1
    %s38 = scalar_select %p35, %s36, %s37
    %p41 = pneg %p35
    %p42 = scmp.eq.s32.totalorder %s8, 1
    %p43 = por %p41, %p42
    %p44 = scmp.ne.s32.totalorder %s36, %s39
    %p45 = scmp.eq.s32.totalorder %s8, 0
    %p46 = por %p44, %p45
    %p47 = scmp.ne.s32.totalorder %s36, %s39
    %p48 = scmp.eq.s32.totalorder %s13, 1
    %p49 = por %p47, %p48
    %p50 = scmp.ne.s32.totalorder %s39, %s40
    %p51 = scmp.eq.s32.totalorder %s13, 0
    %p52 = por %p50, %p51
    %p53 = scmp.ne.s32.totalorder %s39, %s40
    %p54 = scmp.eq.s32.totalorder %s14, 1
    %p55 = por %p53, %p54
    %p57 = scmp.ne.s32.totalorder %s40, %s56
    %p58 = scmp.eq.s32.totalorder %s14, 0
    %p59 = por %p57, %p58
    %s60 = sadd.s32 %s15, %s16
    %p61 = scmp.lt.s32.totalorder %s60, 0
    %s62 = scalar_select %p61, %s60, 0
    %s63 = sadd.s32 %s27, %s23
    %p64 = scmp.lt.s32.totalorder %s63, 0
    %s65 = scalar_select %p64, %s63, 0
    %s66 = ssub.s32 %s62, %s65
    %p67 = scmp.eq.s32.totalorder %s66, 0
    %s69 = sadd.s32 %s68, 1
    %s70 = scalar_select %p67, %s68, %s69
    %p73 = pneg %p67
    %p74 = scmp.eq.s32.totalorder %s8, 1
    %p75 = por %p73, %p74
    %p76 = scmp.ne.s32.totalorder %s68, %s71
    %p77 = scmp.eq.s32.totalorder %s8, 0
    %p78 = por %p76, %p77
    %p79 = scmp.ne.s32.totalorder %s68, %s71
    %p80 = scmp.eq.s32.totalorder %s13, 1
    %p81 = por %p79, %p80
    %p82 = scmp.ne.s32.totalorder %s71, %s72
    %p83 = scmp.eq.s32.totalorder %s13, 0
    %p84 = por %p82, %p83
    %p85 = scmp.ne.s32.totalorder %s71, %s72
    %p86 = scmp.eq.s32.totalorder %s14, 1
    %p87 = por %p85, %p86
    %p89 = scmp.ne.s32.totalorder %s72, %s88
    %p90 = scmp.eq.s32.totalorder %s14, 0
    %p91 = por %p89, %p90
    %s92 = ssub.s32 %s15, %s27
    %p93 = scmp.eq.s32.totalorder %s92, 0
    %s95 = sadd.s32 %s94, 1
    %s96 = scalar_select %p93, %s94, %s95
    %p99 = pneg %p93
    %p100 = scmp.eq.s32.totalorder %s8, 1
    %p101 = por %p99, %p100
    %p102 = scmp.ne.s32.totalorder %s94, %s97
    %p103 = scmp.eq.s32.totalorder %s8, 0
    %p104 = por %p102, %p103
    %p105 = scmp.ne.s32.totalorder %s94, %s97
    %p106 = scmp.eq.s32.totalorder %s13, 1
    %p107 = por %p105, %p106
    %p108 = scmp.ne.s32.totalorder %s97, %s98
    %p109 = scmp.eq.s32.totalorder %s13, 0
    %p110 = por %p108, %p109
    %p111 = scmp.ne.s32.totalorder %s97, %s98
    %p112 = scmp.eq.s32.totalorder %s14, 1
    %p113 = por %p111, %p112
    %p115 = scmp.ne.s32.totalorder %s98, %s114
    %p116 = scmp.eq.s32.totalorder %s14, 0
    %p117 = por %p115, %p116
    %p118 = scmp.le.s32.totalorder 1, %s8
    %p119 = scmp.lt.s32.totalorder %s8, 3
    %p120 = pnand %p118, %p119
    %p121 = pneg %p120
    // Predicated region
    $region9: #{dice_loss_bin.1} parent=5 // pred_check
      _
    $region10: #{dice_loss_bin.1} parent=5 // pred_check_branch
      %123 = sbr.rel (%p120) target = $region12
    $region11: #{dice_loss_bin.1} parent=5 // pred_region
      %s124 = ssub.s32 %s8, 1
    $region12: #{dice_loss_bin.1} parent=5 // pred_fallthru
      _
    %p125 = scmp.lt.s32.totalorder %s8, 2
    // Predicated region
    $region13: #{dice_loss_bin.1} parent=5 // pred_check
      %p126 = pneg %p125
    $region14: #{dice_loss_bin.1} parent=5 // pred_check_branch
      %128 = sbr.rel (%p126) target = $region16
    $region15: #{dice_loss_bin.1} parent=5 // pred_region
      // Predicated region
      $region17: #{dice_loss_bin.1} parent=15 // pred_check
        %p129 = pneg %p46
      $region18: #{dice_loss_bin.1} parent=15 // pred_check_branch
        %131 = sbr.rel (%p129) target = $region20
      $region19: #{dice_loss_bin.1} parent=15 // pred_region
        %s132 = sadd.s32 %s15, %s16
        %p133 = scmp.lt.s32.totalorder %s132, 0
        %s134 = scalar_select %p133, %s132, 0
        %s135 = smul.u32 2, %s134
        %p136 = scmp.lt.s32.totalorder %s135, 1
        %s137 = scalar_select %p136, %s135, 1
        %s138 = smul.addr %s137, 8
        %s139 = scalar_lea.vmem %s0, %s138
        %s140 = sadd.s32 %s15, %s16
        %p141 = scmp.lt.s32.totalorder %s140, 0
        %s142 = scalar_select %p141, %s140, 0
        %s143 = smul.u32 2, %s142
      $region20: #{dice_loss_bin.1} parent=15 // pred_fallthru
        _
      // Predicated region
      $region21: #{dice_loss_bin.1} parent=15 // pred_check
        %p144 = pneg %p78
      $region22: #{dice_loss_bin.1} parent=15 // pred_check_branch
        %146 = sbr.rel (%p144) target = $region24
      $region23: #{dice_loss_bin.1} parent=15 // pred_region
        %s147 = sadd.s32 %s15, %s16
        %p148 = scmp.lt.s32.totalorder %s147, 0
        %s149 = scalar_select %p148, %s147, 0
        %s150 = smul.u32 2, %s149
        %p151 = scmp.lt.s32.totalorder %s150, 1
        %s152 = scalar_select %p151, %s150, 1
        %s153 = smul.addr %s152, 8
        %s154 = scalar_lea.vmem %s1, %s153
        %s155 = sadd.s32 %s15, %s16
        %p156 = scmp.lt.s32.totalorder %s155, 0
        %s157 = scalar_select %p156, %s155, 0
        %s158 = smul.u32 2, %s157
      $region24: #{dice_loss_bin.1} parent=15 // pred_fallthru
        _
    $region16: #{dice_loss_bin.1} parent=5 // pred_fallthru
      _
    %p159 = scmp.le.s32.totalorder 1, %s8
    %p160 = scmp.lt.s32.totalorder %s8, 3
    %p161 = pnand %p159, %p160
    %p162 = pneg %p161
    // Predicated region
    $region25: #{dice_loss_bin.1} parent=5 // pred_check
      _
    $region26: #{dice_loss_bin.1} parent=5 // pred_check_branch
      %164 = sbr.rel (%p161) target = $region28
    $region27: #{dice_loss_bin.1} parent=5 // pred_region
      %s165 = ssub.s32 %s8, 1
      %s166 = sadd.s32 %s17, %s18
      %p167 = scmp.lt.s32.totalorder %s166, 0
      %s168 = scalar_select %p167, %s166, 0
      %s169 = smul.u32 2, %s168
      %p170 = scmp.lt.s32.totalorder %s169, 1
      %s171 = scalar_select %p170, %s169, 1
      %s172 = smul.addr %s171, 8
      %s173 = scalar_lea.vmem %s0, %s172
      %p174 = pneg %p52
      %p175 = pneg %p49
      %s176 = sadd.s32 %s17, %s18
      %p177 = scmp.lt.s32.totalorder %s176, 0
      %s178 = scalar_select %p177, %s176, 0
      %s179 = smul.u32 2, %s178
      %p180 = scmp.lt.s32.totalorder %s179, 1
      %s181 = scalar_select %p180, %s179, 1
      %s182 = smul.addr %s181, 8
      %s183 = scalar_lea.vmem %s1, %s182
      %p184 = pneg %p84
      %p185 = pneg %p81
      %p186 = pneg %p110
      %p187 = pneg %p107
      %s188 = smul.u32 3, %s17
      %p189 = scmp.lt.s32.totalorder %s188, 5
      %s190 = scalar_select %p189, %s188, 5
      %s191 = smul.addr %s190, 8
      %s192 = scalar_lea.vmem %s2, %s191
      %s193 = sadd.s32 %s17, %s18
      %p194 = scmp.lt.s32.totalorder %s193, 0
      %s195 = scalar_select %p194, %s193, 0
      %s196 = smul.u32 2, %s195
      %p197 = scmp.lt.s32.totalorder %s196, 1
      %s198 = scalar_select %p197, %s196, 1
      %s199 = smul.addr %s198, 8
      %s200 = scalar_lea.vmem %s0, %s199
      %s201 = sadd.s32 %s17, %s18
      %p202 = scmp.lt.s32.totalorder %s201, 0
      %s203 = scalar_select %p202, %s201, 0
      %s204 = smul.u32 2, %s203
      %s205 = sadd.s32 %s17, %s18
      %p206 = scmp.lt.s32.totalorder %s205, 0
      %s207 = scalar_select %p206, %s205, 0
      %s208 = smul.u32 2, %s207
      %p209 = scmp.lt.s32.totalorder %s208, 1
      %s210 = scalar_select %p209, %s208, 1
      %s211 = smul.addr %s210, 8
      %s212 = scalar_lea.vmem %s1, %s211
      %s213 = sadd.s32 %s17, %s18
      %p214 = scmp.lt.s32.totalorder %s213, 0
      %s215 = scalar_select %p214, %s213, 0
      %s216 = smul.u32 2, %s215
      %s217 = smul.u32 3, %s17
      %p218 = scmp.lt.s32.totalorder %s217, 5
      %s219 = scalar_select %p218, %s217, 5
      %s220 = smul.addr %s219, 8
      %s221 = scalar_lea.vmem %s2, %s220
      %s222 = smul.u32 3, %s17
      %p223 = scmp.eq.s32.totalorder %s18, 0
      // Predicated region
      $region29: #{dice_loss_bin.1} parent=27 // pred_check
        %p224 = pneg %p223
      $region30: #{dice_loss_bin.1} parent=27 // pred_check_branch
        %226 = sbr.rel (%p224) target = $region32
      $region31: #{dice_loss_bin.1} parent=27 // pred_region
        %227 = vst [vmem:[%s221] sm:$0xff] 0.0
        %228 = vst [vmem:[%s221 + $0x8] sm:$0xff] 0.0
        %229 = vst [vmem:[%s221 + $0x10] sm:$0xff] 0.0
      $region32: #{dice_loss_bin.1} parent=27 // pred_fallthru
        _
      %s230 = sadd.s32 %s17, %s18
      %s231 = smul.u32 %s230, 2
      %s232 = sadd.s32 %s231, 2
      %p233 = scmp.le.s32.totalorder %s232, 2
      // Predicated region
      $region33: #{dice_loss_bin.1} parent=27 // pred_check
        %p234 = pneg %p233
      $region34: #{dice_loss_bin.1} parent=27 // pred_check_branch
        %236 = sbr.rel (%p234) target = $region36
      $region35: #{dice_loss_bin.1} parent=27 // pred_region
        %s237 = smul.u32 0, 8
        %s238 = scalar_lea.vmem %s200, %s237
        %v239 = vld [vmem:[%s238] sm:$0xff]
        %v240 = vld [vmem:[%s238 + $0x8] sm:$0xff]
        %s241 = scalar_lea.vmem %s212, %s237
        %v242 = vld [vmem:[%s241] sm:$0xff]
        %v243 = vld [vmem:[%s241 + $0x8] sm:$0xff]
        %v244 = vand.u32 2147483647, %v239
        %v245 = vand.u32 2147483647, %v240
        %v246 = vsub.f32 0.0, %v244
        %v247 = vsub.f32 0.0, %v245
        %v248 = vmul.f32 %v246, 1.442695
        %v249 = vpow.pop %v248
        %v250 = vmul.f32 %v247, 1.442695
        %v251 = vpow.pop %v250
        %v252 = vadd.f32 %v249, 1.0
        %v253 = vadd.f32 %v251, 1.0
        %v254 = vrcp.pop %v252
        %v255 = vrcp.pop %v253
        %vm256 = vcmp.ge.f32.partialorder %v239, 0.0
        %vm257 = vcmp.ge.f32.partialorder %v240, 0.0
        %v258 = vsub.f32 1.0, %v254
        %v259 = vsub.f32 1.0, %v255
        %v260 = vsel %vm256, %v254, %v258
        %v261 = vsel %vm257, %v255, %v259
        %v262 = vmax.f32 %v239, 0.0
        %v263 = vmax.f32 %v240, 0.0
        %v264 = vmul.f32 %v239, %v242
        %v265 = vmul.f32 %v240, %v243
        %v266 = vsub.f32 %v262, %v264
        %v267 = vsub.f32 %v263, %v265
        %v268 = vadd.f32 %v249, 1.0
        %v269 = vlog2.pop %v268
        %v270 = vmul.f32 %v269, 0.6931472
        %v271 = vmul.f32 -0.5, %v249
        %v272 = vadd.f32 %v271, 1.0
        %v273 = vmul.f32 %v272, %v249
        %v274 = vand.u32 2147483647, %v249
        %vm275 = vcmp.lt.f32.partialorder %v274, 0.0004427343
        %v276 = vsel %vm275, %v273, %v270
        %v277 = vadd.f32 %v251, 1.0
        %v278 = vlog2.pop %v277
        %v279 = vmul.f32 %v278, 0.6931472
        %v280 = vmul.f32 -0.5, %v251
        %v281 = vadd.f32 %v280, 1.0
        %v282 = vmul.f32 %v281, %v251
        %v283 = vand.u32 2147483647, %v251
        %vm284 = vcmp.lt.f32.partialorder %v283, 0.0004427343
        %v285 = vsel %vm284, %v282, %v279
        %v286 = vadd.f32 %v266, %v276
        %v287 = vadd.f32 %v267, %v285
        %v288 = vadd.f32 %v286, %v287
        %v289 = vadd.f32 %v288, 0.0
        %v290 = vmul.f32 %v242, %v260
        %v291 = vmul.f32 %v243, %v261
        %v292 = vadd.f32 %v290, %v291
        %v293 = vadd.f32 %v292, 0.0
        %v294 = vadd.f32 %v260, %v242
        %v295 = vadd.f32 %v261, %v243
        %v296 = vadd.f32 %v294, %v295
        %v297 = vadd.f32 %v296, 0.0
        %v298 = vld [vmem:[%s221] sm:$0xff]
        %v299 = vadd.f32 %v298, %v289
        %300 = vst [vmem:[%s221] sm:$0xff] %v299
        %s301 = scalar_lea.vmem %s221, 8
        %v302 = vld [vmem:[%s301] sm:$0xff]
        %v303 = vadd.f32 %v302, %v293
        %304 = vst [vmem:[%s301] sm:$0xff] %v303
        %s305 = scalar_lea.vmem %s221, 16
        %v306 = vld [vmem:[%s305] sm:$0xff]
        %v307 = vadd.f32 %v306, %v297
        %308 = vst [vmem:[%s305] sm:$0xff] %v307
      $region36: #{dice_loss_bin.1} parent=27 // pred_fallthru
        _
      %p309 = scmp.gt.s32.totalorder %s232, 2
      // Predicated region
      $region37: #{dice_loss_bin.1} parent=27 // pred_check
        %p310 = pneg %p309
      $region38: #{dice_loss_bin.1} parent=27 // pred_check_branch
        %312 = sbr.rel (%p310) target = $region40
      $region39: #{dice_loss_bin.1} parent=27 // pred_region
        %s313 = smul.u32 0, 8
        %s314 = scalar_lea.vmem %s200, %s313
        %v315 = vld [vmem:[%s314] sm:$0xff]
        %v316 = vld [vmem:[%s314 + $0x8] sm:$0xff]
        %s317 = scalar_lea.vmem %s212, %s313
        %v318 = vld [vmem:[%s317] sm:$0xff]
        %v319 = vld [vmem:[%s317 + $0x8] sm:$0xff]
        %s320 = sadd.s32 %s231, 0
        %v321 = vstv %s320
        %v322 = vadd.s32 %v321, 1
        %vm323 = vcmp.lt.s32.totalorder %v321, 2
        %vm324 = vcmp.lt.s32.totalorder %v322, 2
        %v325 = vsel %vm323, %v315, -100.0
        %v326 = vsel %vm324, %v316, -100.0
        %v327 = vsel %vm323, %v318, 0.0
        %v328 = vsel %vm324, %v319, 0.0
        %v329 = vand.u32 2147483647, %v325
        %v330 = vand.u32 2147483647, %v326
        %v331 = vsub.f32 0.0, %v329
        %v332 = vsub.f32 0.0, %v330
        %v333 = vmul.f32 %v331, 1.442695
        %v334 = vpow.pop %v333
        %v335 = vmul.f32 %v332, 1.442695
        %v336 = vpow.pop %v335
        %v337 = vadd.f32 %v334, 1.0
        %v338 = vadd.f32 %v336, 1.0
        %v339 = vrcp.pop %v337
        %v340 = vrcp.pop %v338
        %vm341 = vcmp.ge.f32.partialorder %v325, 0.0
        %vm342 = vcmp.ge.f32.partialorder %v326, 0.0
        %v343 = vsub.f32 1.0, %v339
        %v344 = vsub.f32 1.0, %v340
        %v345 = vsel %vm341, %v339, %v343
        %v346 = vsel %vm342, %v340, %v344
        %v347 = vsel %vm323, %v345, 0.0
        %v348 = vsel %vm324, %v346, 0.0
        %v349 = vmax.f32 %v325, 0.0
        %v350 = vmax.f32 %v326, 0.0
        %v351 = vmul.f32 %v325, %v327
        %v352 = vmul.f32 %v326, %v328
        %v353 = vsub.f32 %v349, %v351
        %v354 = vsub.f32 %v350, %v352
        %v355 = vadd.f32 %v334, 1.0
        %v356 = vlog2.pop %v355
        %v357 = vmul.f32 %v356, 0.6931472
        %v358 = vmul.f32 -0.5, %v334
        %v359 = vadd.f32 %v358, 1.0
        %v360 = vmul.f32 %v359, %v334
        %v361 = vand.u32 2147483647, %v334
        %vm362 = vcmp.lt.f32.partialorder %v361, 0.0004427343
        %v363 = vsel %vm362, %v360, %v357
        %v364 = vadd.f32 %v336, 1.0
        %v365 = vlog2.pop %v364
        %v366 = vmul.f32 %v365, 0.6931472
        %v367 = vmul.f32 -0.5, %v336
        %v368 = vadd.f32 %v367, 1.0
        %v369 = vmul.f32 %v368, %v336
        %v370 = vand.u32 2147483647, %v336
        %vm371 = vcmp.lt.f32.partialorder %v370, 0.0004427343
        %v372 = vsel %vm371, %v369, %v366
        %v373 = vadd.f32 %v353, %v363
        %v374 = vadd.f32 %v354, %v372
        %v375 = vadd.f32 %v373, %v374
        %v376 = vadd.f32 %v375, 0.0
        %v377 = vmul.f32 %v327, %v347
        %v378 = vmul.f32 %v328, %v348
        %v379 = vadd.f32 %v377, %v378
        %v380 = vadd.f32 %v379, 0.0
        %v381 = vadd.f32 %v347, %v327
        %v382 = vadd.f32 %v348, %v328
        %v383 = vadd.f32 %v381, %v382
        %v384 = vadd.f32 %v383, 0.0
        %v385 = vld [vmem:[%s221] sm:$0xff]
        %v386 = vadd.f32 %v385, %v376
        %387 = vst [vmem:[%s221] sm:$0xff] %v386
        %s388 = scalar_lea.vmem %s221, 8
        %v389 = vld [vmem:[%s388] sm:$0xff]
        %v390 = vadd.f32 %v389, %v380
        %391 = vst [vmem:[%s388] sm:$0xff] %v390
        %s392 = scalar_lea.vmem %s221, 16
        %v393 = vld [vmem:[%s392] sm:$0xff]
        %v394 = vadd.f32 %v393, %v384
        %395 = vst [vmem:[%s392] sm:$0xff] %v394
      $region40: #{dice_loss_bin.1} parent=27 // pred_fallthru
        _
      %s396 = smul.u32 3, %s17
      %p397 = scmp.lt.s32.totalorder %s396, 5
      %s398 = scalar_select %p397, %s396, 5
      %s399 = smul.addr %s398, 8
      %s400 = scalar_lea.vmem %s2, %s399
      // Predicated region
      $region41: #{dice_loss_bin.1} parent=27 // pred_check
        %p401 = pneg %p107
      $region42: #{dice_loss_bin.1} parent=27 // pred_check_branch
        %403 = sbr.rel (%p401) target = $region44
      $region43: #{dice_loss_bin.1} parent=27 // pred_region
        %s404 = smul.u32 3, %s17
      $region44: #{dice_loss_bin.1} parent=27 // pred_fallthru
        _
    $region28: #{dice_loss_bin.1} parent=5 // pred_fallthru
      _
    %p405 = scmp.le.s32.totalorder 2, %s8
    // Predicated region
    $region45: #{dice_loss_bin.1} parent=5 // pred_check
      %p406 = pneg %p405
    $region46: #{dice_loss_bin.1} parent=5 // pred_check_branch
      %408 = sbr.rel (%p406) target = $region48
    $region47: #{dice_loss_bin.1} parent=5 // pred_region
      %s409 = ssub.s32 %s8, 2
      // Predicated region
      $region49: #{dice_loss_bin.1} parent=47 // pred_check
        %p410 = pneg %p113
      $region50: #{dice_loss_bin.1} parent=47 // pred_check_branch
        %412 = sbr.rel (%p410) target = $region52
      $region51: #{dice_loss_bin.1} parent=47 // pred_region
        %s413 = smul.u32 3, %s19
        %p414 = scmp.lt.s32.totalorder %s413, 5
        %s415 = scalar_select %p414, %s413, 5
        %s416 = smul.addr %s415, 8
        %s417 = scalar_lea.vmem %s2, %s416
      $region52: #{dice_loss_bin.1} parent=47 // pred_fallthru
        _
    $region48: #{dice_loss_bin.1} parent=5 // pred_fallthru
      _
  $region6: #{dice_loss_bin.1} parent=0 // loop_footer
    %s12 = sadd.s32 1, %s8
  $region7: #{dice_loss_bin.1} parent=0 // loop_footer_branch
    %7 = sbr.rel target = $region3
  $region8: #{dice_loss_bin.1} parent=0 // loop_exit
    _

</llo_original>
